<compile_context>
chip_gen: v6e
topology: v6e:2x2x1
jax: 0.10.0
libtpu: 0.0.40
codegen_flags: <defaults>
</compile_context>

<pallas_src>
import functools

import jax
import jax.numpy as jnp
from jax.experimental import pallas as pl
from jax.experimental.pallas import tpu as pltpu

IN_DIM = 28 * 28
H1 = 128
H2 = 64
OUT = 10


def _mlp_kernel(x_ref, w1_ref, b1_ref, w2_ref, b2_ref, w3_ref, b3_ref, o_ref):
    # x_ref: (tb, 784) f32   w*: bf16   b*: f32   o_ref: (tb, 10) f32
    x = x_ref[...].astype(jnp.bfloat16)
    h1 = jnp.dot(x, w1_ref[...], preferred_element_type=jnp.float32) + b1_ref[...]
    h1 = jnp.maximum(h1, 0.0)
    h2 = (jnp.dot(h1.astype(jnp.bfloat16), w2_ref[...],
                  preferred_element_type=jnp.float32) + b2_ref[...])
    h2 = jnp.maximum(h2, 0.0)
    o_ref[...] = (jnp.dot(h2.astype(jnp.bfloat16), w3_ref[...],
                          preferred_element_type=jnp.float32) + b3_ref[...])


def _round_up(x, m):
    return ((x + m - 1) // m) * m


def _pick_tb(batch, tb_max):
    """Largest MXU-friendly batch tile (multiple of 8), but keep >=2 grid steps
    when the batch allows it so dimension_semantics=("parallel",) can shard the
    grid across v7x's two TensorCores."""
    if batch >= 2 * tb_max:
        return tb_max
    return max(8, _round_up(pl.cdiv(batch, 2), 8))


@functools.partial(jax.jit, static_argnames=("tb_max",))
def simple_nn_forward(x, params, *, tb_max=512):
    """x: (B, 1, 28, 28) float32 (NCHW). Returns logits (B, 10) float32."""
    w1, b1, w2, b2, w3, b3 = params
    B = x.shape[0]
    xf = x.reshape(B, IN_DIM)  # row-major flatten, matches torch .view(-1, 784)

    # Weights cast to bf16 once (tiny); accumulation stays f32 in the kernel.
    w1b = w1.astype(jnp.bfloat16)
    w2b = w2.astype(jnp.bfloat16)
    w3b = w3.astype(jnp.bfloat16)

    tb = _pick_tb(B, tb_max)
    grid = (pl.cdiv(B, tb),)  # ragged last tile handled by Pallas; no jnp.pad

    full = lambda i: (0, 0)  # weights/biases: whole array, constant block index

    flops = 2 * B * (IN_DIM * H1 + H1 * H2 + H2 * OUT)
    bytes_accessed = (
        B * IN_DIM * 4                              # stream x (f32)
        + 2 * (IN_DIM * H1 + H1 * H2 + H2 * OUT)    # bf16 weights
        + 4 * (H1 + H2 + OUT)                       # f32 biases
        + B * OUT * 4                               # logits out
    )
    cost = pl.CostEstimate(flops=flops, transcendentals=0,
                           bytes_accessed=bytes_accessed)

    out = pl.pallas_call(
        _mlp_kernel,
        out_shape=jax.ShapeDtypeStruct((B, OUT), jnp.float32),
        grid_spec=pltpu.PrefetchScalarGridSpec(
            num_scalar_prefetch=0,
            grid=grid,
            in_specs=[
                pl.BlockSpec((tb, IN_DIM), lambda i: (i, 0)),  # x tile
                pl.BlockSpec((IN_DIM, H1), full),              # w1 (bf16)
                pl.BlockSpec((1, H1), full),                   # b1
                pl.BlockSpec((H1, H2), full),                  # w2 (bf16)
                pl.BlockSpec((1, H2), full),                   # b2
                pl.BlockSpec((H2, OUT), full),                 # w3 (bf16)
                pl.BlockSpec((1, OUT), full),                  # b3
            ],
            out_specs=pl.BlockSpec((tb, OUT), lambda i: (i, 0)),
        ),
        compiler_params=pltpu.CompilerParams(
            dimension_semantics=("parallel",),
            vmem_limit_bytes=32 * 1024 * 1024,
        ),
        cost_estimate=cost,
    )(xf, w1b, b1, w2b, b2, w3b, b3)

    return out


def init_params(key):
    """Deterministic init mimicking nn.Linear (uniform +/- 1/sqrt(fan_in))."""
    def linear(key, fan_in, fan_out):
        kw, kb = jax.random.split(key)
        bound = 1.0 / jnp.sqrt(fan_in)
        w = jax.random.uniform(kw, (fan_in, fan_out), jnp.float32, -bound, bound)
        b = jax.random.uniform(kb, (1, fan_out), jnp.float32, -bound, bound)
        return w, b

    k1, k2, k3 = jax.random.split(key, 3)
    w1, b1 = linear(k1, IN_DIM, H1)
    w2, b2 = linear(k2, H1, H2)
    w3, b3 = linear(k3, H2, OUT)
    return (w1, b1, w2, b2, w3, b3)


def reference_forward(x, params):
    """Pure-JAX reference with the same bf16-input / f32-accumulate precision."""
    w1, b1, w2, b2, w3, b3 = params
    bf = jnp.bfloat16
    xf = x.reshape(x.shape[0], IN_DIM)
    h1 = jnp.maximum(
        jnp.dot(xf.astype(bf), w1.astype(bf), preferred_element_type=jnp.float32) + b1, 0.0)
    h2 = jnp.maximum(
        jnp.dot(h1.astype(bf), w2.astype(bf), preferred_element_type=jnp.float32) + b2, 0.0)
    return jnp.dot(h2.astype(bf), w3.astype(bf), preferred_element_type=jnp.float32) + b3


if __name__ == "__main__":
    key = jax.random.PRNGKey(0)
    kx, kp = jax.random.split(key)

    # Small MNIST-like batch: (B, 1, 28, 28) NCHW
    x = jax.random.normal(kx, (2, 1, 28, 28), dtype=jnp.float32)
    params = init_params(kp)

    out = simple_nn_forward(x, params)
    out = jax.block_until_ready(out)

    ref = reference_forward(x, params)
    assert out.shape == (2, 10), out.shape
    assert jnp.allclose(out, ref, atol=1e-2, rtol=1e-2), "mismatch vs reference"

    print("KERNEL_OK")
</pallas_src>

<mosaic_0001>
module attributes {stable_mosaic.version = 11 : i64} {
  func.func @_mlp_kernel(%arg0: i32, %arg1: memref<8x784xf32, #tpu.memory_space<vmem>>, %arg2: memref<784x128xbf16, #tpu.memory_space<vmem>>, %arg3: memref<1x128xf32, #tpu.memory_space<vmem>>, %arg4: memref<128x64xbf16, #tpu.memory_space<vmem>>, %arg5: memref<1x64xf32, #tpu.memory_space<vmem>>, %arg6: memref<64x10xbf16, #tpu.memory_space<vmem>>, %arg7: memref<1x10xf32, #tpu.memory_space<vmem>>, %arg8: memref<8x10xf32, #tpu.memory_space<vmem>>) attributes {dimension_semantics = [#tpu.dimension_semantics<parallel>], iteration_bounds = array<i64: 1>, scalar_prefetch = 0 : i64, scratch_operands = 0 : i64, tpu.core_type = #tpu.core_type<tc>, window_params = [{transform_indices = @transform_0, window_bounds = array<i64: 8, 784>}, {pipeline_mode = #tpu.pipeline_mode<synchronous>, transform_indices = @transform_1, window_bounds = array<i64: 784, 128>}, {pipeline_mode = #tpu.pipeline_mode<synchronous>, transform_indices = @transform_2, window_bounds = array<i64: 1, 128>}, {pipeline_mode = #tpu.pipeline_mode<synchronous>, transform_indices = @transform_3, window_bounds = array<i64: 128, 64>}, {pipeline_mode = #tpu.pipeline_mode<synchronous>, transform_indices = @transform_4, window_bounds = array<i64: 1, 64>}, {pipeline_mode = #tpu.pipeline_mode<synchronous>, transform_indices = @transform_5, window_bounds = array<i64: 64, 10>}, {pipeline_mode = #tpu.pipeline_mode<synchronous>, transform_indices = @transform_6, window_bounds = array<i64: 1, 10>}, {transform_indices = @transform_7, window_bounds = array<i64: 8, 10>}]} {
    %c0 = arith.constant 0 : index
    %c0_0 = arith.constant 0 : index
    %0 = vector.load %arg1[%c0, %c0_0] : memref<8x784xf32, #tpu.memory_space<vmem>>, vector<8x784xf32>
    %1 = arith.truncf %0 : vector<8x784xf32> to vector<8x784xbf16>
    %c0_1 = arith.constant 0 : index
    %c0_2 = arith.constant 0 : index
    %2 = vector.load %arg2[%c0_1, %c0_2] : memref<784x128xbf16, #tpu.memory_space<vmem>>, vector<784x128xbf16>
    %cst = arith.constant dense<0.000000e+00> : vector<8x128xf32>
    %3 = tpu.matmul %1, %2, %cst {dimension_numbers = #tpu.dot_dimension_numbers<[1], [0], [0], [1], [0, 0, 1, 1], [], []>} : vector<8x784xbf16>, vector<784x128xbf16>, vector<8x128xf32> -> vector<8x128xf32>
    %c0_3 = arith.constant 0 : index
    %c0_4 = arith.constant 0 : index
    %4 = vector.load %arg3[%c0_3, %c0_4] : memref<1x128xf32, #tpu.memory_space<vmem>>, vector<1x128xf32>
    %5 = vector.broadcast %4 : vector<1x128xf32> to vector<8x128xf32>
    %6 = arith.addf %3, %5 : vector<8x128xf32>
    %cst_5 = arith.constant 0.000000e+00 : f32
    %7 = vector.broadcast %cst_5 : f32 to vector<8x128xf32>
    %8 = arith.maximumf %6, %7 : vector<8x128xf32>
    %9 = arith.truncf %8 : vector<8x128xf32> to vector<8x128xbf16>
    %c0_6 = arith.constant 0 : index
    %c0_7 = arith.constant 0 : index
    %10 = vector.load %arg4[%c0_6, %c0_7] : memref<128x64xbf16, #tpu.memory_space<vmem>>, vector<128x64xbf16>
    %cst_8 = arith.constant dense<0.000000e+00> : vector<8x64xf32>
    %11 = tpu.matmul %9, %10, %cst_8 {dimension_numbers = #tpu.dot_dimension_numbers<[1], [0], [0], [1], [0, 0, 1, 1], [], []>} : vector<8x128xbf16>, vector<128x64xbf16>, vector<8x64xf32> -> vector<8x64xf32>
    %c0_9 = arith.constant 0 : index
    %c0_10 = arith.constant 0 : index
    %12 = vector.load %arg5[%c0_9, %c0_10] : memref<1x64xf32, #tpu.memory_space<vmem>>, vector<1x64xf32>
    %13 = vector.broadcast %12 : vector<1x64xf32> to vector<8x64xf32>
    %14 = arith.addf %11, %13 : vector<8x64xf32>
    %cst_11 = arith.constant 0.000000e+00 : f32
    %15 = vector.broadcast %cst_11 : f32 to vector<8x64xf32>
    %16 = arith.maximumf %14, %15 : vector<8x64xf32>
    %17 = arith.truncf %16 : vector<8x64xf32> to vector<8x64xbf16>
    %c0_12 = arith.constant 0 : index
    %c0_13 = arith.constant 0 : index
    %18 = vector.load %arg6[%c0_12, %c0_13] : memref<64x10xbf16, #tpu.memory_space<vmem>>, vector<64x10xbf16>
    %cst_14 = arith.constant dense<0.000000e+00> : vector<8x10xf32>
    %19 = tpu.matmul %17, %18, %cst_14 {dimension_numbers = #tpu.dot_dimension_numbers<[1], [0], [0], [1], [0, 0, 1, 1], [], []>} : vector<8x64xbf16>, vector<64x10xbf16>, vector<8x10xf32> -> vector<8x10xf32>
    %c0_15 = arith.constant 0 : index
    %c0_16 = arith.constant 0 : index
    %20 = vector.load %arg7[%c0_15, %c0_16] : memref<1x10xf32, #tpu.memory_space<vmem>>, vector<1x10xf32>
    %21 = vector.broadcast %20 : vector<1x10xf32> to vector<8x10xf32>
    %22 = arith.addf %19, %21 : vector<8x10xf32>
    %c0_17 = arith.constant 0 : index
    %c0_18 = arith.constant 0 : index
    %23 = vector.load %arg8[%c0_17, %c0_18] : memref<8x10xf32, #tpu.memory_space<vmem>>, vector<8x10xf32>
    tpu.vector_store %arg8[%c0_17, %c0_18], %22 {strides = array<i32>} : memref<8x10xf32, #tpu.memory_space<vmem>>, vector<8x10xf32>,
    return
  }
  func.func @transform_0(%arg0: i32) -> (i32, i32) {
    %c0_i32 = arith.constant 0 : i32
    %c0_i32_0 = arith.constant 0 : i32
    return %arg0, %c0_i32 : i32, i32
  }
  func.func @transform_1(%arg0: i32) -> (i32, i32) {
    %c0_i32 = arith.constant 0 : i32
    %c0_i32_0 = arith.constant 0 : i32
    %c0_i32_1 = arith.constant 0 : i32
    return %c0_i32, %c0_i32_0 : i32, i32
  }
  func.func @transform_2(%arg0: i32) -> (i32, i32) {
    %c0_i32 = arith.constant 0 : i32
    %c0_i32_0 = arith.constant 0 : i32
    %c0_i32_1 = arith.constant 0 : i32
    return %c0_i32, %c0_i32_0 : i32, i32
  }
  func.func @transform_3(%arg0: i32) -> (i32, i32) {
    %c0_i32 = arith.constant 0 : i32
    %c0_i32_0 = arith.constant 0 : i32
    %c0_i32_1 = arith.constant 0 : i32
    return %c0_i32, %c0_i32_0 : i32, i32
  }
  func.func @transform_4(%arg0: i32) -> (i32, i32) {
    %c0_i32 = arith.constant 0 : i32
    %c0_i32_0 = arith.constant 0 : i32
    %c0_i32_1 = arith.constant 0 : i32
    return %c0_i32, %c0_i32_0 : i32, i32
  }
  func.func @transform_5(%arg0: i32) -> (i32, i32) {
    %c0_i32 = arith.constant 0 : i32
    %c0_i32_0 = arith.constant 0 : i32
    %c0_i32_1 = arith.constant 0 : i32
    return %c0_i32, %c0_i32_0 : i32, i32
  }
  func.func @transform_6(%arg0: i32) -> (i32, i32) {
    %c0_i32 = arith.constant 0 : i32
    %c0_i32_0 = arith.constant 0 : i32
    %c0_i32_1 = arith.constant 0 : i32
    return %c0_i32, %c0_i32_0 : i32, i32
  }
  func.func @transform_7(%arg0: i32) -> (i32, i32) {
    %c0_i32 = arith.constant 0 : i32
    %c0_i32_0 = arith.constant 0 : i32
    return %arg0, %c0_i32 : i32, i32
  }
}

</mosaic_0001>

<llo_original>
// kernel: simple_nn_forward.1
$region0: #{simple_nn_forward.1}
  #allocation0 [shape = 'u32[]', space=smem, size = 0x4, offset = 0x4, fixed_abs, tag = 'smem constant byte address 0x4 - core index']
  #allocation1 [shape = 'u32[144,128]{1,0:T(1,128)}', space=vmem, size = 0x12000, scoped, tag = 'internal scratch']
  %s0 = inlined_call_operand.vmem [shape: f32[2,784], index: 0, kind: input, shape index: {}]
  %s1 = inlined_call_operand.vmem [shape: bf16[784,128], index: 1, kind: input, shape index: {}]
  %s2 = inlined_call_operand.vmem [shape: f32[1,128], index: 2, kind: input, shape index: {}]
  %s3 = inlined_call_operand.vmem [shape: bf16[128,64], index: 3, kind: input, shape index: {}]
  %s4 = inlined_call_operand.vmem [shape: f32[1,64], index: 4, kind: input, shape index: {}]
  %s5 = inlined_call_operand.vmem [shape: bf16[64,10], index: 5, kind: input, shape index: {}]
  %s6 = inlined_call_operand.vmem [shape: f32[1,10], index: 6, kind: input, shape index: {}]
  %s7 = inlined_call_operand.hbm [shape: f32[2,10], index: 7, kind: output, shape index: {}]
  %s8 = sld [smem:[#allocation0]]
  $region38: #{simple_nn_forward.1} parent=0
    _
  %s10 = ssub.s32 1, %s8
  %s11 = scalar_select 0, %s10, %s8
  $region1: #{simple_nn_forward.1} parent=0
    #allocation2 [shape = 'u8[4096]{0}', space=vmem, size = 0x1000, scoped, tag = 'output window, operand 0, single buffered']
    #allocation3 [shape = 's32[1]{0}', space=sflag, size = 0x4, scoped, tag = 'scoped memory for simple_nn_forward.1']
    %12 = vsyncpa [#allocation3], 0
    // Predicated region
    $region2: #{simple_nn_forward.1} parent=1 // pred_check
      _
    $region3: #{simple_nn_forward.1} parent=1 // pred_check_branch
      %14 = sbr.rel (0) target = $region5
    $region4: #{simple_nn_forward.1} parent=1 // pred_region
      _
    $region5: #{simple_nn_forward.1} parent=1 // pred_fallthru
      _
    // Predicated region
    $region6: #{simple_nn_forward.1} parent=1 // pred_check
      _
    $region7: #{simple_nn_forward.1} parent=1 // pred_check_branch
      %16 = sbr.rel (0) target = $region9
    $region8: #{simple_nn_forward.1} parent=1 // pred_region
      _
    $region9: #{simple_nn_forward.1} parent=1 // pred_fallthru
      _
    // Predicated region
    $region10: #{simple_nn_forward.1} parent=1 // pred_check
      _
    $region11: #{simple_nn_forward.1} parent=1 // pred_check_branch
      %18 = sbr.rel (0) target = $region13
    $region12: #{simple_nn_forward.1} parent=1 // pred_region
      _
    $region13: #{simple_nn_forward.1} parent=1 // pred_fallthru
      _
    // Predicated region
    $region14: #{simple_nn_forward.1} parent=1 // pred_check
      _
    $region15: #{simple_nn_forward.1} parent=1 // pred_check_branch
      %20 = sbr.rel (0) target = $region17
    $region16: #{simple_nn_forward.1} parent=1 // pred_region
      _
    $region17: #{simple_nn_forward.1} parent=1 // pred_fallthru
      _
    // Predicated region
    $region18: #{simple_nn_forward.1} parent=1 // pred_check
      _
    $region19: #{simple_nn_forward.1} parent=1 // pred_check_branch
      %22 = sbr.rel (0) target = $region21
    $region20: #{simple_nn_forward.1} parent=1 // pred_region
      _
    $region21: #{simple_nn_forward.1} parent=1 // pred_fallthru
      _
    // Predicated region
    $region22: #{simple_nn_forward.1} parent=1 // pred_check
      _
    $region23: #{simple_nn_forward.1} parent=1 // pred_check_branch
      %24 = sbr.rel (0) target = $region25
    $region24: #{simple_nn_forward.1} parent=1 // pred_region
      _
    $region25: #{simple_nn_forward.1} parent=1 // pred_fallthru
      _
    // Predicated region
    $region26: #{simple_nn_forward.1} parent=1 // pred_check
      _
    $region27: #{simple_nn_forward.1} parent=1 // pred_check_branch
      %26 = sbr.rel (0) target = $region29
    $region28: #{simple_nn_forward.1} parent=1 // pred_region
      _
    $region29: #{simple_nn_forward.1} parent=1 // pred_fallthru
      _
    %v28 = vld [vmem:[%s0] sm:$0xff]
    %v29 = vld [vmem:[%s0 + $0x8] sm:$0x3f]
    %v30 = vld [vmem:[%s0 + $0xe] sm:$0xff]
    %v31 = vld [vmem:[%s0 + $0x16] sm:$0x3f]
    %v32 = vld [vmem:[%s0 + $0x1c] sm:$0xff]
    %v33 = vld [vmem:[%s0 + $0x24] sm:$0x3f]
    %v34 = vld [vmem:[%s0 + $0x2a] sm:$0xff]
    %v35 = vld [vmem:[%s0 + $0x32] sm:$0x3f]
    %v44 = vcombine.low %v28, %v30
    %v45 = vcombine.high %v28, %v30
    %v46 = vcombine.low %v32, %v34
    %v47 = vcombine.high %v32, %v34
    %v49 = vunpack.c.l.s4 1983009808
    %v50 = vunpack.c.0.s8 %v49
    %v51 = vlaneseq
    %v52 = vshrl.u32 %v51, 7
    %v53 = vsub.s32 %v50, %v52
    %v54 = vrot.slane %v44, %v53
    %v56 = vunpack.c.l.s4 1983009808
    %v57 = vunpack.c.0.s8 %v56
    %v58 = vlaneseq
    %v59 = vshrl.u32 %v58, 7
    %v60 = vsub.s32 %v57, %v59
    %v61 = vrot.slane %v45, %v60
    %v63 = vunpack.c.l.s4 1983009808
    %v64 = vunpack.c.0.s8 %v63
    %v65 = vlaneseq
    %v66 = vshrl.u32 %v65, 7
    %v67 = vsub.s32 %v64, %v66
    %v68 = vrot.slane %v46, %v67
    %v70 = vunpack.c.l.s4 1983009808
    %v71 = vunpack.c.0.s8 %v70
    %v72 = vlaneseq
    %v73 = vshrl.u32 %v72, 7
    %v74 = vsub.s32 %v71, %v73
    %v75 = vrot.slane %v47, %v74
    %v76 = vcombine.low %v54, %v68
    %v77 = vcombine.high %v54, %v68
    %v78 = vcombine.low %v61, %v75
    %v79 = vcombine.high %v61, %v75
    %v80 = vcombine.low %v29, %v31
    %v81 = vcombine.high %v29, %v31
    %v82 = vcombine.low %v33, %v35
    %v83 = vcombine.high %v33, %v35
    %v85 = vunpack.c.l.s4 1983009808
    %v86 = vunpack.c.0.s8 %v85
    %v87 = vlaneseq
    %v88 = vshrl.u32 %v87, 7
    %v89 = vsub.s32 %v86, %v88
    %v90 = vrot.slane %v80, %v89
    %v92 = vunpack.c.l.s4 1983009808
    %v93 = vunpack.c.0.s8 %v92
    %v94 = vlaneseq
    %v95 = vshrl.u32 %v94, 7
    %v96 = vsub.s32 %v93, %v95
    %v97 = vrot.slane %v81, %v96
    %v99 = vunpack.c.l.s4 1983009808
    %v100 = vunpack.c.0.s8 %v99
    %v101 = vlaneseq
    %v102 = vshrl.u32 %v101, 7
    %v103 = vsub.s32 %v100, %v102
    %v104 = vrot.slane %v82, %v103
    %v106 = vunpack.c.l.s4 1983009808
    %v107 = vunpack.c.0.s8 %v106
    %v108 = vlaneseq
    %v109 = vshrl.u32 %v108, 7
    %v110 = vsub.s32 %v107, %v109
    %v111 = vrot.slane %v83, %v110
    %v112 = vcombine.low %v90, %v104
    %v113 = vcombine.high %v90, %v104
    %v114 = vcombine.low %v97, %v111
    %v122 = vpack.c.bf16 %v76, %v76
    %v123 = vpack.c.bf16 %v77, %v77
    %v124 = vpack.c.bf16 %v78, %v78
    %v125 = vpack.c.bf16 %v79, %v79
    %v126 = vpack.c.bf16 %v112, %v112
    %v127 = vpack.c.bf16 %v113, %v113
    %v128 = vpack.c.bf16 %v114, %v114
    %v129 = vld [vmem:[%s1] sm:$0xf]
    %v130 = vld [vmem:[%s1 + $0x4] sm:$0xf]
    %v131 = vld [vmem:[%s1 + $0x8] sm:$0xf]
    %v132 = vld [vmem:[%s1 + $0xc] sm:$0xf]
    %v133 = vld [vmem:[%s1 + $0x10] sm:$0xf]
    %v134 = vld [vmem:[%s1 + $0x14] sm:$0xf]
    %v135 = vld [vmem:[%s1 + $0x18] sm:$0xf]
    %v136 = vld [vmem:[%s1 + $0x1c] sm:$0xf]
    %v137 = vld [vmem:[%s1 + $0x20] sm:$0xf]
    %v138 = vld [vmem:[%s1 + $0x24] sm:$0xf]
    %v139 = vld [vmem:[%s1 + $0x28] sm:$0xf]
    %v140 = vld [vmem:[%s1 + $0x2c] sm:$0xf]
    %v141 = vld [vmem:[%s1 + $0x30] sm:$0xf]
    %v142 = vld [vmem:[%s1 + $0x34] sm:$0xf]
    %v143 = vld [vmem:[%s1 + $0x38] sm:$0xf]
    %v144 = vld [vmem:[%s1 + $0x3c] sm:$0xf]
    %v145 = vld [vmem:[%s1 + $0x40] sm:$0xf]
    %v146 = vld [vmem:[%s1 + $0x44] sm:$0xf]
    %v147 = vld [vmem:[%s1 + $0x48] sm:$0xf]
    %v148 = vld [vmem:[%s1 + $0x4c] sm:$0xf]
    %v149 = vld [vmem:[%s1 + $0x50] sm:$0xf]
    %v150 = vld [vmem:[%s1 + $0x54] sm:$0xf]
    %v151 = vld [vmem:[%s1 + $0x58] sm:$0xf]
    %v152 = vld [vmem:[%s1 + $0x5c] sm:$0xf]
    %v153 = vld [vmem:[%s1 + $0x60] sm:$0xf]
    %v154 = vld [vmem:[%s1 + $0x64] sm:$0xf]
    %v155 = vld [vmem:[%s1 + $0x68] sm:$0xf]
    %v156 = vld [vmem:[%s1 + $0x6c] sm:$0xf]
    %v157 = vld [vmem:[%s1 + $0x70] sm:$0xf]
    %v158 = vld [vmem:[%s1 + $0x74] sm:$0xf]
    %v159 = vld [vmem:[%s1 + $0x78] sm:$0xf]
    %v160 = vld [vmem:[%s1 + $0x7c] sm:$0xf]
    %v161 = vld [vmem:[%s1 + $0x80] sm:$0xf]
    %v162 = vld [vmem:[%s1 + $0x84] sm:$0xf]
    %v163 = vld [vmem:[%s1 + $0x88] sm:$0xf]
    %v164 = vld [vmem:[%s1 + $0x8c] sm:$0xf]
    %v165 = vld [vmem:[%s1 + $0x90] sm:$0xf]
    %v166 = vld [vmem:[%s1 + $0x94] sm:$0xf]
    %v167 = vld [vmem:[%s1 + $0x98] sm:$0xf]
    %v168 = vld [vmem:[%s1 + $0x9c] sm:$0xf]
    %v169 = vld [vmem:[%s1 + $0xa0] sm:$0xf]
    %v170 = vld [vmem:[%s1 + $0xa4] sm:$0xf]
    %v171 = vld [vmem:[%s1 + $0xa8] sm:$0xf]
    %v172 = vld [vmem:[%s1 + $0xac] sm:$0xf]
    %v173 = vld [vmem:[%s1 + $0xb0] sm:$0xf]
    %v174 = vld [vmem:[%s1 + $0xb4] sm:$0xf]
    %v175 = vld [vmem:[%s1 + $0xb8] sm:$0xf]
    %v176 = vld [vmem:[%s1 + $0xbc] sm:$0xf]
    %v177 = vld [vmem:[%s1 + $0xc0] sm:$0xf]
    %v178 = vld [vmem:[%s1 + $0xc4] sm:$0xf]
    %v179 = vld [vmem:[%s1 + $0xc8] sm:$0xf]
    %v180 = vld [vmem:[%s1 + $0xcc] sm:$0xf]
    %v181 = vld [vmem:[%s1 + $0xd0] sm:$0xf]
    %v182 = vld [vmem:[%s1 + $0xd4] sm:$0xf]
    %v183 = vld [vmem:[%s1 + $0xd8] sm:$0xf]
    %v184 = vld [vmem:[%s1 + $0xdc] sm:$0xf]
    %v185 = vld [vmem:[%s1 + $0xe0] sm:$0xf]
    %v186 = vld [vmem:[%s1 + $0xe4] sm:$0xf]
    %v187 = vld [vmem:[%s1 + $0xe8] sm:$0xf]
    %v188 = vld [vmem:[%s1 + $0xec] sm:$0xf]
    %v189 = vld [vmem:[%s1 + $0xf0] sm:$0xf]
    %v190 = vld [vmem:[%s1 + $0xf4] sm:$0xf]
    %v191 = vld [vmem:[%s1 + $0xf8] sm:$0xf]
    %v192 = vld [vmem:[%s1 + $0xfc] sm:$0xf]
    %v193 = vld [vmem:[%s1 + $0x100] sm:$0xf]
    %v194 = vld [vmem:[%s1 + $0x104] sm:$0xf]
    %v195 = vld [vmem:[%s1 + $0x108] sm:$0xf]
    %v196 = vld [vmem:[%s1 + $0x10c] sm:$0xf]
    %v197 = vld [vmem:[%s1 + $0x110] sm:$0xf]
    %v198 = vld [vmem:[%s1 + $0x114] sm:$0xf]
    %v199 = vld [vmem:[%s1 + $0x118] sm:$0xf]
    %v200 = vld [vmem:[%s1 + $0x11c] sm:$0xf]
    %v201 = vld [vmem:[%s1 + $0x120] sm:$0xf]
    %v202 = vld [vmem:[%s1 + $0x124] sm:$0xf]
    %v203 = vld [vmem:[%s1 + $0x128] sm:$0xf]
    %v204 = vld [vmem:[%s1 + $0x12c] sm:$0xf]
    %v205 = vld [vmem:[%s1 + $0x130] sm:$0xf]
    %v206 = vld [vmem:[%s1 + $0x134] sm:$0xf]
    %v207 = vld [vmem:[%s1 + $0x138] sm:$0xf]
    %v208 = vld [vmem:[%s1 + $0x13c] sm:$0xf]
    %v209 = vld [vmem:[%s1 + $0x140] sm:$0xf]
    %v210 = vld [vmem:[%s1 + $0x144] sm:$0xf]
    %v211 = vld [vmem:[%s1 + $0x148] sm:$0xf]
    %v212 = vld [vmem:[%s1 + $0x14c] sm:$0xf]
    %v213 = vld [vmem:[%s1 + $0x150] sm:$0xf]
    %v214 = vld [vmem:[%s1 + $0x154] sm:$0xf]
    %v215 = vld [vmem:[%s1 + $0x158] sm:$0xf]
    %v216 = vld [vmem:[%s1 + $0x15c] sm:$0xf]
    %v217 = vld [vmem:[%s1 + $0x160] sm:$0xf]
    %v218 = vld [vmem:[%s1 + $0x164] sm:$0xf]
    %v219 = vld [vmem:[%s1 + $0x168] sm:$0xf]
    %v220 = vld [vmem:[%s1 + $0x16c] sm:$0xf]
    %v221 = vld [vmem:[%s1 + $0x170] sm:$0xf]
    %v222 = vld [vmem:[%s1 + $0x174] sm:$0xf]
    %v223 = vld [vmem:[%s1 + $0x178] sm:$0xf]
    %v224 = vld [vmem:[%s1 + $0x17c] sm:$0xf]
    %v225 = vld [vmem:[%s1 + $0x180] sm:$0xf]
    %v226 = vld [vmem:[%s1 + $0x184] sm:$0xf]
    %v227 = vld [vmem:[%s2] sm:$0x1]
    %v229 = vlaneseq
    %v230 = vshrl.u32 %v229, 7
    %v231 = vsub.s32 0, %v230
    %v232 = vrot.slane %v227, %v231
    %v332 = vunpack.c.l.b16 %v129
    %v333 = vunpack.c.l.b16 %v130
    %v334 = vunpack.c.l.b16 %v131
    %v335 = vunpack.c.l.b16 %v132
    %v336 = vunpack.c.l.b16 %v133
    %v337 = vunpack.c.l.b16 %v134
    %v338 = vunpack.c.l.b16 %v135
    %v339 = vunpack.c.l.b16 %v136
    %v340 = vunpack.c.l.b16 %v137
    %v341 = vunpack.c.l.b16 %v138
    %v342 = vunpack.c.l.b16 %v139
    %v343 = vunpack.c.l.b16 %v140
    %v344 = vunpack.c.l.b16 %v141
    %v345 = vunpack.c.l.b16 %v142
    %v346 = vunpack.c.l.b16 %v143
    %v347 = vunpack.c.l.b16 %v144
    %v348 = vunpack.c.l.b16 %v145
    %v349 = vunpack.c.l.b16 %v146
    %v350 = vunpack.c.l.b16 %v147
    %v351 = vunpack.c.l.b16 %v148
    %v352 = vunpack.c.l.b16 %v149
    %v353 = vunpack.c.l.b16 %v150
    %v354 = vunpack.c.l.b16 %v151
    %v355 = vunpack.c.l.b16 %v152
    %v356 = vunpack.c.l.b16 %v153
    %v357 = vunpack.c.l.b16 %v154
    %v358 = vunpack.c.l.b16 %v155
    %v359 = vunpack.c.l.b16 %v156
    %v360 = vunpack.c.l.b16 %v157
    %v361 = vunpack.c.l.b16 %v158
    %v362 = vunpack.c.l.b16 %v159
    %v363 = vunpack.c.l.b16 %v160
    %v364 = vunpack.c.l.b16 %v161
    %v365 = vunpack.c.l.b16 %v162
    %v366 = vunpack.c.l.b16 %v163
    %v367 = vunpack.c.l.b16 %v164
    %v368 = vunpack.c.l.b16 %v165
    %v369 = vunpack.c.l.b16 %v166
    %v370 = vunpack.c.l.b16 %v167
    %v371 = vunpack.c.l.b16 %v168
    %v372 = vunpack.c.l.b16 %v169
    %v373 = vunpack.c.l.b16 %v170
    %v374 = vunpack.c.l.b16 %v171
    %v375 = vunpack.c.l.b16 %v172
    %v376 = vunpack.c.l.b16 %v173
    %v377 = vunpack.c.l.b16 %v174
    %v378 = vunpack.c.l.b16 %v175
    %v379 = vunpack.c.l.b16 %v176
    %v380 = vunpack.c.l.b16 %v177
    %v381 = vunpack.c.l.b16 %v178
    %v382 = vunpack.c.l.b16 %v179
    %v383 = vunpack.c.l.b16 %v180
    %v384 = vunpack.c.l.b16 %v181
    %v385 = vunpack.c.l.b16 %v182
    %v386 = vunpack.c.l.b16 %v183
    %v387 = vunpack.c.l.b16 %v184
    %v388 = vunpack.c.l.b16 %v185
    %v389 = vunpack.c.l.b16 %v186
    %v390 = vunpack.c.l.b16 %v187
    %v391 = vunpack.c.l.b16 %v188
    %v392 = vunpack.c.l.b16 %v189
    %v393 = vunpack.c.l.b16 %v190
    %v394 = vunpack.c.l.b16 %v191
    %v395 = vunpack.c.l.b16 %v192
    %v396 = vunpack.c.l.b16 %v193
    %v397 = vunpack.c.l.b16 %v194
    %v398 = vunpack.c.l.b16 %v195
    %v399 = vunpack.c.l.b16 %v196
    %v400 = vunpack.c.l.b16 %v197
    %v401 = vunpack.c.l.b16 %v198
    %v402 = vunpack.c.l.b16 %v199
    %v403 = vunpack.c.l.b16 %v200
    %v404 = vunpack.c.l.b16 %v201
    %v405 = vunpack.c.l.b16 %v202
    %v406 = vunpack.c.l.b16 %v203
    %v407 = vunpack.c.l.b16 %v204
    %v408 = vunpack.c.l.b16 %v205
    %v409 = vunpack.c.l.b16 %v206
    %v410 = vunpack.c.l.b16 %v207
    %v411 = vunpack.c.l.b16 %v208
    %v412 = vunpack.c.l.b16 %v209
    %v413 = vunpack.c.l.b16 %v210
    %v414 = vunpack.c.l.b16 %v211
    %v415 = vunpack.c.l.b16 %v212
    %v416 = vunpack.c.l.b16 %v213
    %v417 = vunpack.c.l.b16 %v214
    %v418 = vunpack.c.l.b16 %v215
    %v419 = vunpack.c.l.b16 %v216
    %v420 = vunpack.c.l.b16 %v217
    %v421 = vunpack.c.l.b16 %v218
    %v422 = vunpack.c.l.b16 %v219
    %v423 = vunpack.c.l.b16 %v220
    %v424 = vunpack.c.l.b16 %v221
    %v425 = vunpack.c.l.b16 %v222
    %v426 = vunpack.c.l.b16 %v223
    %v427 = vunpack.c.l.b16 %v224
    %v428 = vunpack.c.l.b16 %v225
    %v429 = vunpack.c.l.b16 %v226
    %v430 = vpack.c.b16 %v333, %v332
    %v431 = vpack.c.b16 %v335, %v334
    %v432 = vpack.c.b16 %v337, %v336
    %v433 = vpack.c.b16 %v339, %v338
    %v434 = vpack.c.b16 %v341, %v340
    %v435 = vpack.c.b16 %v343, %v342
    %v436 = vpack.c.b16 %v345, %v344
    %v437 = vpack.c.b16 %v347, %v346
    %v438 = vpack.c.b16 %v349, %v348
    %v439 = vpack.c.b16 %v351, %v350
    %v440 = vpack.c.b16 %v353, %v352
    %v441 = vpack.c.b16 %v355, %v354
    %v442 = vpack.c.b16 %v357, %v356
    %v443 = vpack.c.b16 %v359, %v358
    %v444 = vpack.c.b16 %v361, %v360
    %v445 = vpack.c.b16 %v363, %v362
    %v446 = vpack.c.b16 %v365, %v364
    %v447 = vpack.c.b16 %v367, %v366
    %v448 = vpack.c.b16 %v369, %v368
    %v449 = vpack.c.b16 %v371, %v370
    %v450 = vpack.c.b16 %v373, %v372
    %v451 = vpack.c.b16 %v375, %v374
    %v452 = vpack.c.b16 %v377, %v376
    %v453 = vpack.c.b16 %v379, %v378
    %v454 = vpack.c.b16 %v381, %v380
    %v455 = vpack.c.b16 %v383, %v382
    %v456 = vpack.c.b16 %v385, %v384
    %v457 = vpack.c.b16 %v387, %v386
    %v458 = vpack.c.b16 %v389, %v388
    %v459 = vpack.c.b16 %v391, %v390
    %v460 = vpack.c.b16 %v393, %v392
    %v461 = vpack.c.b16 %v395, %v394
    %v462 = vpack.c.b16 %v397, %v396
    %v463 = vpack.c.b16 %v399, %v398
    %v464 = vpack.c.b16 %v401, %v400
    %v465 = vpack.c.b16 %v403, %v402
    %v466 = vpack.c.b16 %v405, %v404
    %v467 = vpack.c.b16 %v407, %v406
    %v468 = vpack.c.b16 %v409, %v408
    %v469 = vpack.c.b16 %v411, %v410
    %v470 = vpack.c.b16 %v413, %v412
    %v471 = vpack.c.b16 %v415, %v414
    %v472 = vpack.c.b16 %v417, %v416
    %v473 = vpack.c.b16 %v419, %v418
    %v474 = vpack.c.b16 %v421, %v420
    %v475 = vpack.c.b16 %v423, %v422
    %v476 = vpack.c.b16 %v425, %v424
    %v477 = vpack.c.b16 %v427, %v426
    %v478 = vpack.c.b16 %v429, %v428
    %vm528 = vcmask 130048
    %v530 = vsel %vm528, %v128, 0
    %532 = vmatprep.subr.bf16.mxu0 0
    %533 = vmatpush1.bf16.msra.mxu0 %v437
    %534 = vmatprep.subr.bf16.mxu0 0
    %535 = vmatpush1.bf16.msra.mxu0 %v436
    %536 = vmatprep.subr.bf16.mxu0 0
    %537 = vmatpush1.bf16.msra.mxu0 %v435
    %538 = vmatprep.subr.bf16.mxu0 0
    %539 = vmatpush1.bf16.msra.mxu0 %v434
    %540 = vmatprep.subr.bf16.mxu0 0
    %541 = vmatpush1.bf16.msra.mxu0 %v433
    %542 = vmatprep.subr.bf16.mxu0 0
    %543 = vmatpush1.bf16.msra.mxu0 %v432
    %544 = vmatprep.subr.bf16.mxu0 0
    %545 = vmatpush1.bf16.msra.mxu0 %v431
    %546 = vmatprep.subr.bf16.mxu0 0
    %547 = vmatpush1.bf16.msra.mxu0 %v430
    %548 = vmatprep.subr.bf16.mxu0 0
    %549 = vmatpush2.bf16.msra.mxu0 %v445
    %550 = vmatprep.subr.bf16.mxu0 0
    %551 = vmatpush2.bf16.msra.mxu0 %v444
    %552 = vmatprep.subr.bf16.mxu0 0
    %553 = vmatpush2.bf16.msra.mxu0 %v443
    %554 = vmatprep.subr.bf16.mxu0 0
    %555 = vmatpush2.bf16.msra.mxu0 %v442
    %556 = vmatprep.subr.bf16.mxu0 0
    %557 = vmatpush2.bf16.msra.mxu0 %v441
    %558 = vmatprep.subr.bf16.mxu0 0
    %559 = vmatpush2.bf16.msra.mxu0 %v440
    %560 = vmatprep.subr.bf16.mxu0 0
    %561 = vmatpush2.bf16.msra.mxu0 %v439
    %562 = vmatprep.subr.bf16.mxu0 0
    %563 = vmatpush2.bf16.msra.mxu0 %v438
    %564 = vmatprep.mubr.bf16.mxu0 %v123
    %565 = vmatmul.mubr.bf16.gmra.mxu0 %v122
    %v566 = vpop.f32.mrf.mxu0
    %v567 = vadd.f32 %v232, %v566
    %v568 = vpop.f32.mrf.mxu0
    %v569 = vpop.f32.mrf.mxu0
    %v570 = vpop.f32.mrf.mxu0
    %571 = vdwg.mxu0
    %572 = vmatprep.subr.bf16.mxu0 0
    %573 = vmatpush1.bf16.msra.mxu0 %v453
    %574 = vmatprep.subr.bf16.mxu0 0
    %575 = vmatpush1.bf16.msra.mxu0 %v452
    %576 = vmatprep.subr.bf16.mxu0 0
    %577 = vmatpush1.bf16.msra.mxu0 %v451
    %578 = vmatprep.subr.bf16.mxu0 0
    %579 = vmatpush1.bf16.msra.mxu0 %v450
    %580 = vmatprep.subr.bf16.mxu0 0
    %581 = vmatpush1.bf16.msra.mxu0 %v449
    %582 = vmatprep.subr.bf16.mxu0 0
    %583 = vmatpush1.bf16.msra.mxu0 %v448
    %584 = vmatprep.subr.bf16.mxu0 0
    %585 = vmatpush1.bf16.msra.mxu0 %v447
    %586 = vmatprep.subr.bf16.mxu0 0
    %587 = vmatpush1.bf16.msra.mxu0 %v446
    %588 = vmatprep.subr.bf16.mxu0 0
    %589 = vmatpush2.bf16.msra.mxu0 %v461
    %590 = vmatprep.subr.bf16.mxu0 0
    %591 = vmatpush2.bf16.msra.mxu0 %v460
    %592 = vmatprep.subr.bf16.mxu0 0
    %593 = vmatpush2.bf16.msra.mxu0 %v459
    %594 = vmatprep.subr.bf16.mxu0 0
    %595 = vmatpush2.bf16.msra.mxu0 %v458
    %596 = vmatprep.subr.bf16.mxu0 0
    %597 = vmatpush2.bf16.msra.mxu0 %v457
    %598 = vmatprep.subr.bf16.mxu0 0
    %599 = vmatpush2.bf16.msra.mxu0 %v456
    %600 = vmatprep.subr.bf16.mxu0 0
    %601 = vmatpush2.bf16.msra.mxu0 %v455
    %602 = vmatprep.subr.bf16.mxu0 0
    %603 = vmatpush2.bf16.msra.mxu0 %v454
    %604 = vmatprep.mubr.bf16.mxu0 %v125
    %605 = vmatmul.mubr.bf16.gmra.mxu0 %v124
    %v606 = vpop.f32.mrf.mxu0
    %v607 = vadd.f32 %v567, %v606
    %v608 = vpop.f32.mrf.mxu0
    %v609 = vpop.f32.mrf.mxu0
    %v610 = vpop.f32.mrf.mxu0
    %611 = vdwg.mxu0
    %612 = vmatprep.subr.bf16.mxu0 0
    %613 = vmatpush1.bf16.msra.mxu0 %v469
    %614 = vmatprep.subr.bf16.mxu0 0
    %615 = vmatpush1.bf16.msra.mxu0 %v468
    %616 = vmatprep.subr.bf16.mxu0 0
    %617 = vmatpush1.bf16.msra.mxu0 %v467
    %618 = vmatprep.subr.bf16.mxu0 0
    %619 = vmatpush1.bf16.msra.mxu0 %v466
    %620 = vmatprep.subr.bf16.mxu0 0
    %621 = vmatpush1.bf16.msra.mxu0 %v465
    %622 = vmatprep.subr.bf16.mxu0 0
    %623 = vmatpush1.bf16.msra.mxu0 %v464
    %624 = vmatprep.subr.bf16.mxu0 0
    %625 = vmatpush1.bf16.msra.mxu0 %v463
    %626 = vmatprep.subr.bf16.mxu0 0
    %627 = vmatpush1.bf16.msra.mxu0 %v462
    %628 = vmatprep.subr.bf16.mxu0 0
    %629 = vmatpush2.bf16.msra.mxu0 %v477
    %630 = vmatprep.subr.bf16.mxu0 0
    %631 = vmatpush2.bf16.msra.mxu0 %v476
    %632 = vmatprep.subr.bf16.mxu0 0
    %633 = vmatpush2.bf16.msra.mxu0 %v475
    %634 = vmatprep.subr.bf16.mxu0 0
    %635 = vmatpush2.bf16.msra.mxu0 %v474
    %636 = vmatprep.subr.bf16.mxu0 0
    %637 = vmatpush2.bf16.msra.mxu0 %v473
    %638 = vmatprep.subr.bf16.mxu0 0
    %639 = vmatpush2.bf16.msra.mxu0 %v472
    %640 = vmatprep.subr.bf16.mxu0 0
    %641 = vmatpush2.bf16.msra.mxu0 %v471
    %642 = vmatprep.subr.bf16.mxu0 0
    %643 = vmatpush2.bf16.msra.mxu0 %v470
    %644 = vmatprep.mubr.bf16.mxu0 %v127
    %645 = vmatmul.mubr.bf16.gmra.mxu0 %v126
    %v646 = vpop.f32.mrf.mxu0
    %v647 = vadd.f32 %v607, %v646
    %v648 = vpop.f32.mrf.mxu0
    %v649 = vpop.f32.mrf.mxu0
    %v650 = vpop.f32.mrf.mxu0
    %651 = vdwg.mxu0
    %652 = vmatprep.subr.bf16.mxu0 0
    %653 = vmatpush1.bf16.msra.mxu0 0
    %654 = vmatprep.subr.bf16.mxu0 0
    %655 = vmatpush1.bf16.msra.mxu0 0
    %656 = vmatprep.subr.bf16.mxu0 0
    %657 = vmatpush1.bf16.msra.mxu0 0
    %658 = vmatprep.subr.bf16.mxu0 0
    %659 = vmatpush1.bf16.msra.mxu0 0
    %660 = vmatprep.subr.bf16.mxu0 0
    %661 = vmatpush1.bf16.msra.mxu0 0
    %662 = vmatprep.subr.bf16.mxu0 0
    %663 = vmatpush1.bf16.msra.mxu0 0
    %664 = vmatprep.subr.bf16.mxu0 0
    %665 = vmatpush1.bf16.msra.mxu0 0
    %666 = vmatprep.subr.bf16.mxu0 0
    %667 = vmatpush1.bf16.msra.mxu0 %v478
    %668 = vmatprep.subr.bf16.mxu0 0
    %669 = vmatpush2.bf16.msra.mxu0 0
    %670 = vmatprep.subr.bf16.mxu0 0
    %671 = vmatpush2.bf16.msra.mxu0 0
    %672 = vmatprep.subr.bf16.mxu0 0
    %673 = vmatpush2.bf16.msra.mxu0 0
    %674 = vmatprep.subr.bf16.mxu0 0
    %675 = vmatpush2.bf16.msra.mxu0 0
    %676 = vmatprep.subr.bf16.mxu0 0
    %677 = vmatpush2.bf16.msra.mxu0 0
    %678 = vmatprep.subr.bf16.mxu0 0
    %679 = vmatpush2.bf16.msra.mxu0 0
    %680 = vmatprep.subr.bf16.mxu0 0
    %681 = vmatpush2.bf16.msra.mxu0 0
    %682 = vmatprep.subr.bf16.mxu0 0
    %683 = vmatpush2.bf16.msra.mxu0 0
    %684 = vmatprep.mubr.bf16.mxu0 0
    %685 = vmatmul.mubr.bf16.gmra.mxu0 %v530
    %v686 = vpop.f32.mrf.mxu0
    %v687 = vadd.f32 %v647, %v686
    %v688 = vpop.f32.mrf.mxu0
    %v689 = vpop.f32.mrf.mxu0
    %v690 = vpop.f32.mrf.mxu0
    %691 = vdwg.mxu0
    %v692 = vmax.f32 %v687, 0.0
    %v693 = vpack.c.bf16 %v692, %v692
    %v694 = vld [vmem:[%s3] sm:$0xf]
    %v695 = vld [vmem:[%s3 + $0x4] sm:$0xf]
    %v696 = vld [vmem:[%s3 + $0x8] sm:$0xf]
    %v697 = vld [vmem:[%s3 + $0xc] sm:$0xf]
    %v698 = vld [vmem:[%s3 + $0x10] sm:$0xf]
    %v699 = vld [vmem:[%s3 + $0x14] sm:$0xf]
    %v700 = vld [vmem:[%s3 + $0x18] sm:$0xf]
    %v701 = vld [vmem:[%s3 + $0x1c] sm:$0xf]
    %v702 = vld [vmem:[%s3 + $0x20] sm:$0xf]
    %v703 = vld [vmem:[%s3 + $0x24] sm:$0xf]
    %v704 = vld [vmem:[%s3 + $0x28] sm:$0xf]
    %v705 = vld [vmem:[%s3 + $0x2c] sm:$0xf]
    %v706 = vld [vmem:[%s3 + $0x30] sm:$0xf]
    %v707 = vld [vmem:[%s3 + $0x34] sm:$0xf]
    %v708 = vld [vmem:[%s3 + $0x38] sm:$0xf]
    %v709 = vld [vmem:[%s3 + $0x3c] sm:$0xf]
    %v710 = vld [vmem:[%s4] sm:$0x1]
    %v712 = vlaneseq
    %v713 = vshrl.u32 %v712, 7
    %v714 = vsub.s32 0, %v713
    %v715 = vrot.slane %v710, %v714
    %v733 = vunpack.c.l.b16 %v694
    %v734 = vunpack.c.l.b16 %v695
    %v735 = vunpack.c.l.b16 %v696
    %v736 = vunpack.c.l.b16 %v697
    %v737 = vunpack.c.l.b16 %v698
    %v738 = vunpack.c.l.b16 %v699
    %v739 = vunpack.c.l.b16 %v700
    %v740 = vunpack.c.l.b16 %v701
    %v741 = vunpack.c.l.b16 %v702
    %v742 = vunpack.c.l.b16 %v703
    %v743 = vunpack.c.l.b16 %v704
    %v744 = vunpack.c.l.b16 %v705
    %v745 = vunpack.c.l.b16 %v706
    %v746 = vunpack.c.l.b16 %v707
    %v747 = vunpack.c.l.b16 %v708
    %v748 = vunpack.c.l.b16 %v709
    %v749 = vpack.c.b16 %v734, %v733
    %v750 = vpack.c.b16 %v736, %v735
    %v751 = vpack.c.b16 %v738, %v737
    %v752 = vpack.c.b16 %v740, %v739
    %v753 = vpack.c.b16 %v742, %v741
    %v754 = vpack.c.b16 %v744, %v743
    %v755 = vpack.c.b16 %v746, %v745
    %v756 = vpack.c.b16 %v748, %v747
    %765 = vmatprep.subr.bf16.mxu0 0
    %766 = vmatpush1.bf16.msra.mxu0 %v756
    %767 = vmatprep.subr.bf16.mxu0 0
    %768 = vmatpush1.bf16.msra.mxu0 %v755
    %769 = vmatprep.subr.bf16.mxu0 0
    %770 = vmatpush1.bf16.msra.mxu0 %v754
    %771 = vmatprep.subr.bf16.mxu0 0
    %772 = vmatpush1.bf16.msra.mxu0 %v753
    %773 = vmatprep.subr.bf16.mxu0 0
    %774 = vmatpush1.bf16.msra.mxu0 %v752
    %775 = vmatprep.subr.bf16.mxu0 0
    %776 = vmatpush1.bf16.msra.mxu0 %v751
    %777 = vmatprep.subr.bf16.mxu0 0
    %778 = vmatpush1.bf16.msra.mxu0 %v750
    %779 = vmatprep.subr.bf16.mxu0 0
    %780 = vmatpush1.bf16.msra.mxu0 %v749
    %781 = vmatprep.subr.bf16.mxu0 0
    %782 = vmatpush2.bf16.msra.mxu0 0
    %783 = vmatprep.subr.bf16.mxu0 0
    %784 = vmatpush2.bf16.msra.mxu0 0
    %785 = vmatprep.subr.bf16.mxu0 0
    %786 = vmatpush2.bf16.msra.mxu0 0
    %787 = vmatprep.subr.bf16.mxu0 0
    %788 = vmatpush2.bf16.msra.mxu0 0
    %789 = vmatprep.subr.bf16.mxu0 0
    %790 = vmatpush2.bf16.msra.mxu0 0
    %791 = vmatprep.subr.bf16.mxu0 0
    %792 = vmatpush2.bf16.msra.mxu0 0
    %793 = vmatprep.subr.bf16.mxu0 0
    %794 = vmatpush2.bf16.msra.mxu0 0
    %795 = vmatprep.subr.bf16.mxu0 0
    %796 = vmatpush2.bf16.msra.mxu0 0
    %797 = vmatprep.mubr.bf16.mxu0 0
    %798 = vmatmul.mubr.bf16.gmra.mxu0 %v693
    %v799 = vpop.f32.mrf.mxu0
    %v800 = vadd.f32 %v715, %v799
    %v801 = vpop.f32.mrf.mxu0
    %v802 = vpop.f32.mrf.mxu0
    %v803 = vpop.f32.mrf.mxu0
    %804 = vdwg.mxu0
    %v805 = vmax.f32 %v800, 0.0
    %v806 = vpack.c.bf16 %v805, %v805
    %v807 = vld [vmem:[%s5] sm:$0xf]
    %v808 = vld [vmem:[%s5 + $0x4] sm:$0xf]
    %v809 = vld [vmem:[%s5 + $0x8] sm:$0xf]
    %v810 = vld [vmem:[%s5 + $0xc] sm:$0xf]
    %v811 = vld [vmem:[%s5 + $0x10] sm:$0xf]
    %v812 = vld [vmem:[%s5 + $0x14] sm:$0xf]
    %v813 = vld [vmem:[%s5 + $0x18] sm:$0xf]
    %v814 = vld [vmem:[%s5 + $0x1c] sm:$0xf]
    %v815 = vld [vmem:[%s6] sm:$0x1]
    %v817 = vlaneseq
    %v818 = vshrl.u32 %v817, 7
    %v819 = vsub.s32 0, %v818
    %v820 = vrot.slane %v815, %v819
    %v830 = vunpack.c.l.b16 %v807
    %v831 = vunpack.c.l.b16 %v808
    %v832 = vunpack.c.l.b16 %v809
    %v833 = vunpack.c.l.b16 %v810
    %v834 = vunpack.c.l.b16 %v811
    %v835 = vunpack.c.l.b16 %v812
    %v836 = vunpack.c.l.b16 %v813
    %v837 = vunpack.c.l.b16 %v814
    %v838 = vpack.c.b16 %v831, %v830
    %v839 = vpack.c.b16 %v833, %v832
    %v840 = vpack.c.b16 %v835, %v834
    %v841 = vpack.c.b16 %v837, %v836
    %vm846 = vcmask 523264
    %v848 = vsel %vm846, %v806, 0
    %850 = vmatprep.subr.bf16.mxu0 0
    %851 = vmatpush1.bf16.msra.mxu0 0
    %852 = vmatprep.subr.bf16.mxu0 0
    %853 = vmatpush1.bf16.msra.mxu0 0
    %854 = vmatprep.subr.bf16.mxu0 0
    %855 = vmatpush1.bf16.msra.mxu0 0
    %856 = vmatprep.subr.bf16.mxu0 0
    %857 = vmatpush1.bf16.msra.mxu0 0
    %858 = vmatprep.subr.bf16.mxu0 0
    %859 = vmatpush1.bf16.msra.mxu0 %v841
    %860 = vmatprep.subr.bf16.mxu0 0
    %861 = vmatpush1.bf16.msra.mxu0 %v840
    %862 = vmatprep.subr.bf16.mxu0 0
    %863 = vmatpush1.bf16.msra.mxu0 %v839
    %864 = vmatprep.subr.bf16.mxu0 0
    %865 = vmatpush1.bf16.msra.mxu0 %v838
    %866 = vmatprep.subr.bf16.mxu0 0
    %867 = vmatpush2.bf16.msra.mxu0 0
    %868 = vmatprep.subr.bf16.mxu0 0
    %869 = vmatpush2.bf16.msra.mxu0 0
    %870 = vmatprep.subr.bf16.mxu0 0
    %871 = vmatpush2.bf16.msra.mxu0 0
    %872 = vmatprep.subr.bf16.mxu0 0
    %873 = vmatpush2.bf16.msra.mxu0 0
    %874 = vmatprep.subr.bf16.mxu0 0
    %875 = vmatpush2.bf16.msra.mxu0 0
    %876 = vmatprep.subr.bf16.mxu0 0
    %877 = vmatpush2.bf16.msra.mxu0 0
    %878 = vmatprep.subr.bf16.mxu0 0
    %879 = vmatpush2.bf16.msra.mxu0 0
    %880 = vmatprep.subr.bf16.mxu0 0
    %881 = vmatpush2.bf16.msra.mxu0 0
    %882 = vmatprep.mubr.bf16.mxu0 0
    %883 = vmatmul.mubr.bf16.gmra.mxu0 %v848
    %v884 = vpop.f32.mrf.mxu0
    %v885 = vadd.f32 %v820, %v884
    %v886 = vpop.f32.mrf.mxu0
    %v887 = vpop.f32.mrf.mxu0
    %v888 = vpop.f32.mrf.mxu0
    %889 = vdwg.mxu0
    %vm890 = vcmask 80896
    %891 = vst.msk [vmem:[#allocation2] sm:$0xff] %vm890, %v885
    // Predicated region
    $region30: #{simple_nn_forward.1} parent=1 // pred_check
      _
    $region31: #{simple_nn_forward.1} parent=1 // pred_check_branch
      %893 = sbr.rel (0) target = $region33
    $region32: #{simple_nn_forward.1} parent=1 // pred_region
      %s895 = ssub.s32 128, 32
      %896 = vsyncadd [#allocation3], %s895
      %s897 = sshll.u32 [#allocation2], 4
      %s898 = int_to_ptr.vmem [resolvable:$true] %s897
      %903 = dma.vmem_to_hbm [thread:$0]  %s898, 32, %s7, [#allocation3], 32, 32, 2
    $region33: #{simple_nn_forward.1} parent=1 // pred_fallthru
      _
    // Predicated region
    $region34: #{simple_nn_forward.1} parent=1 // pred_check
      _
    $region35: #{simple_nn_forward.1} parent=1 // pred_check_branch
      %905 = sbr.rel (0) target = $region37
    $region36: #{simple_nn_forward.1} parent=1 // pred_region
      %906 = dma.done [#allocation3], 128
    $region37: #{simple_nn_forward.1} parent=1 // pred_fallthru
      _
    %907 = vsyncpa [#allocation3], 1

</llo_original>
